<compile_context>
chip_gen: v7x
topology: tpu7x:2x2x1
jax: 0.10.0
libtpu: 0.0.40
codegen_flags: <defaults>
</compile_context>

<pallas_src>
import jax
import jax.numpy as jnp
from jax import lax
from jax.experimental import pallas as pl
from jax.experimental.pallas import tpu as pltpu


_LANES = 128
_SUBLANES = 8
_GROUP = _SUBLANES * _LANES          # 1024 elements = one f32 vreg
_SUB_GROUPS = 8                      # vreg-groups per inner fori step (8 vregs/temp)
_MAX_GROUPS_PER_BLOCK = 1024         # 8192 rows x 128 lanes = 4 MiB f32 / input / buffer
_VMEM_LIMIT_BYTES = 32 * 1024 * 1024


def _partial_sum(x, y):
    """(g, 8, 128) native-dtype values -> (8, 128) f32 per-lane partial sums."""
    x = x.astype(jnp.float32)
    y = y.astype(jnp.float32)
    d = x - y
    ad = jnp.abs(d)
    t = jnp.minimum(ad, 1.0)                 # SmoothL1 beta = 1.0 (PyTorch default)
    loss = t * (ad - 0.5 * t)                # == where(ad < 1, 0.5*d*d, ad - 0.5)
    # Reduce only over the leading (vreg-group) axis: pure VPU vreg adds,
    # no cross-lane / cross-sublane work in the hot loop.
    return jnp.sum(loss, axis=0)


def _make_kernel(g_tile, rem_groups):
    """Kernel closure over static tiling parameters."""

    def kernel(x_ref, y_ref, o_ref):
        blk = pl.program_id(0)

        @pl.when(blk == 0)
        def _init():
            o_ref[...] = jnp.zeros_like(o_ref)

        def accumulate(n_groups):
            # n_groups is a static Python int (<= g_tile), so the ragged tail
            # is a statically-sized slice: no element masking anywhere.
            nfull, tail = divmod(n_groups, _SUB_GROUPS)
            acc = jnp.zeros((_SUBLANES, _LANES), jnp.float32)

            def body(j, acc):
                base = pl.multiple_of(j * _SUB_GROUPS, _SUB_GROUPS)
                return acc + _partial_sum(x_ref[pl.ds(base, _SUB_GROUPS)],
                                          y_ref[pl.ds(base, _SUB_GROUPS)])

            if nfull:
                acc = lax.fori_loop(0, nfull, body, acc, unroll=2)
            if tail:
                base = nfull * _SUB_GROUPS   # static
                acc = acc + _partial_sum(x_ref[pl.ds(base, tail)],
                                         y_ref[pl.ds(base, tail)])
            # Output block index is constant across the grid -> VMEM-resident
            # accumulator; no scratch / epilogue copy needed.
            o_ref[...] += acc

        if rem_groups == 0:
            accumulate(g_tile)
        else:
            last = pl.num_programs(0) - 1

            @pl.when(blk != last)
            def _full():
                accumulate(g_tile)

            @pl.when(blk == last)
            def _ragged():
                accumulate(rem_groups)

    return kernel


def sl1_loss(inputs, targets, *, block_groups=_MAX_GROUPS_PER_BLOCK):
    """Mean SmoothL1 loss (ohem=False path). Returns a () f32 scalar."""
    assert inputs.shape == targets.shape
    n_true = int(inputs.size)
    assert n_true > 0

    # Free flatten (bitcast for contiguous arrays); keep native dtype so HBM
    # traffic stays at input width (bf16 streams as bf16, upcast in-register).
    xf = jnp.ravel(inputs)
    yf = jnp.ravel(targets)

    # Align to one vreg-group (1024 elems).  Aligned inputs take the
    # copy-free path; otherwise pad with zeros (smooth_l1(0, 0) == 0).
    pad = (-n_true) % _GROUP
    if pad:
        xf = jnp.pad(xf, (0, pad))
        yf = jnp.pad(yf, (0, pad))

    groups = (n_true + pad) // _GROUP
    x3 = xf.reshape(groups, _SUBLANES, _LANES)
    y3 = yf.reshape(groups, _SUBLANES, _LANES)

    g_tile = min(block_groups, groups)
    num_blocks = pl.cdiv(groups, g_tile)
    rem_groups = groups % g_tile          # static; last block handles it

    kernel = _make_kernel(g_tile, rem_groups)

    itemsize = jnp.dtype(inputs.dtype).itemsize
    cost = pl.CostEstimate(
        flops=6 * n_true,
        transcendentals=0,
        bytes_accessed=2 * n_true * itemsize + _SUBLANES * _LANES * 4,
    )

    in_map = lambda i: (i, 0, 0)
    partial = pl.pallas_call(
        kernel,
        out_shape=jax.ShapeDtypeStruct((_SUBLANES, _LANES), jnp.float32),
        grid_spec=pltpu.PrefetchScalarGridSpec(
            num_scalar_prefetch=0,
            grid=(num_blocks,),
            in_specs=[
                pl.BlockSpec((g_tile, _SUBLANES, _LANES), in_map),
                pl.BlockSpec((g_tile, _SUBLANES, _LANES), in_map),
            ],
            out_specs=pl.BlockSpec((_SUBLANES, _LANES), lambda i: (0, 0)),
        ),
        compiler_params=pltpu.CompilerParams(
            dimension_semantics=("arbitrary",),
            vmem_limit_bytes=_VMEM_LIMIT_BYTES,
        ),
        cost_estimate=cost,
    )(x3, y3)

    # Final cross-lane reduce + mean in the wrapper; padded / invalid groups
    # contributed exactly 0.
    return jnp.sum(partial) / jnp.float32(n_true)


def _sl1_loss_ref(inputs, targets):
    d = inputs.astype(jnp.float32) - targets.astype(jnp.float32)
    ad = jnp.abs(d)
    loss = jnp.where(ad < 1.0, 0.5 * d * d, ad - 0.5)
    return jnp.mean(loss)


if __name__ == "__main__":
    key = jax.random.PRNGKey(0)
    k1, k2, k3, k4, k5, k6 = jax.random.split(key, 6)

    # NCHW, small shapes: batch=2, channels=4, spatial=16x16 (aligned path).
    x = jax.random.normal(k1, (2, 4, 16, 16), dtype=jnp.float32) * 2.0
    y = jax.random.normal(k2, (2, 4, 16, 16), dtype=jnp.float32) * 2.0
    out = jax.block_until_ready(sl1_loss(x, y))
    ref = jax.block_until_ready(_sl1_loss_ref(x, y))
    assert jnp.allclose(out, ref, atol=1e-5, rtol=1e-5), (out, ref)

    # Unaligned element count (exercises the 1024-alignment tail path).
    x2 = jax.random.normal(k3, (3, 5, 17, 19), dtype=jnp.float32) * 2.0
    y2 = jax.random.normal(k4, (3, 5, 17, 19), dtype=jnp.float32) * 2.0
    out2 = jax.block_until_ready(sl1_loss(x2, y2))
    ref2 = jax.block_until_ready(_sl1_loss_ref(x2, y2))
    assert jnp.allclose(out2, ref2, atol=1e-5, rtol=1e-5), (out2, ref2)

    # Multi-block + ragged last grid block + inner fori path (small block size
    # forced so the test stays small).
    x3 = jax.random.normal(k5, (3, 4, 16, 64), dtype=jnp.float32) * 2.0
    y3 = jax.random.normal(k6, (3, 4, 16, 64), dtype=jnp.float32) * 2.0
    out3 = jax.block_until_ready(sl1_loss(x3, y3, block_groups=8))
    ref3 = jax.block_until_ready(_sl1_loss_ref(x3, y3))
    assert jnp.allclose(out3, ref3, atol=1e-5, rtol=1e-5), (out3, ref3)

    print("KERNEL_OK")
</pallas_src>

<mosaic_0001>
module attributes {stable_mosaic.version = 11 : i64} {
  func.func @kernel(%arg0: i32, %arg1: memref<2x8x128xf32, #tpu.memory_space<vmem>>, %arg2: memref<2x8x128xf32, #tpu.memory_space<vmem>>, %arg3: memref<8x128xf32, #tpu.memory_space<vmem>>) attributes {dimension_semantics = [#tpu.dimension_semantics<arbitrary>], iteration_bounds = array<i64: 1>, scalar_prefetch = 0 : i64, scratch_operands = 0 : i64, tpu.core_type = #tpu.core_type<tc>, window_params = [{transform_indices = @transform_0, window_bounds = array<i64: 2, 8, 128>}, {transform_indices = @transform_1, window_bounds = array<i64: 2, 8, 128>}, {pipeline_mode = #tpu.pipeline_mode<synchronous>, transform_indices = @transform_2, window_bounds = array<i64: 8, 128>}]} {
    %c0_i32 = arith.constant 0 : i32
    %0 = arith.cmpi eq, %arg0, %c0_i32 : i32
    %1 = arith.extui %0 : i1 to i32
    %c0_i32_0 = arith.constant 0 : i32
    %2 = arith.cmpi ne, %1, %c0_i32_0 : i32
    scf.if %2 {
      %cst_13 = arith.constant 0.000000e+00 : f32
      %19 = vector.broadcast %cst_13 : f32 to vector<8x128xf32>
      %c0_14 = arith.constant 0 : index
      %c0_15 = arith.constant 0 : index
      %20 = vector.load %arg3[%c0_14, %c0_15] : memref<8x128xf32, #tpu.memory_space<vmem>>, vector<8x128xf32>
      tpu.vector_store %arg3[%c0_14, %c0_15], %19 {strides = array<i32>} : memref<8x128xf32, #tpu.memory_space<vmem>>, vector<8x128xf32>,
    } else {
    }
    %cst = arith.constant 0.000000e+00 : f32
    %3 = vector.broadcast %cst : f32 to vector<8x128xf32>
    %c0 = arith.constant 0 : index
    %c0_1 = arith.constant 0 : index
    %c0_2 = arith.constant 0 : index
    %4 = vector.load %arg1[%c0, %c0_1, %c0_2] : memref<2x8x128xf32, #tpu.memory_space<vmem>>, vector<2x8x128xf32>
    %c0_3 = arith.constant 0 : index
    %c0_4 = arith.constant 0 : index
    %c0_5 = arith.constant 0 : index
    %5 = vector.load %arg2[%c0_3, %c0_4, %c0_5] : memref<2x8x128xf32, #tpu.memory_space<vmem>>, vector<2x8x128xf32>
    %6 = arith.subf %4, %5 : vector<2x8x128xf32>
    %7 = math.absf %6 : vector<2x8x128xf32>
    %cst_6 = arith.constant 1.000000e+00 : f32
    %8 = vector.broadcast %cst_6 : f32 to vector<2x8x128xf32>
    %9 = arith.minimumf %7, %8 : vector<2x8x128xf32>
    %cst_7 = arith.constant 5.000000e-01 : f32
    %10 = vector.broadcast %cst_7 : f32 to vector<2x8x128xf32>
    %11 = arith.mulf %10, %9 : vector<2x8x128xf32>
    %12 = arith.subf %7, %11 : vector<2x8x128xf32>
    %13 = arith.mulf %9, %12 : vector<2x8x128xf32>
    %cst_8 = arith.constant dense<0.000000e+00> : vector<8x128xf32>
    %14 = vector.multi_reduction <add>, %13, %cst_8 [0] : vector<2x8x128xf32> to vector<8x128xf32>
    %15 = arith.addf %3, %14 : vector<8x128xf32>
    %c0_9 = arith.constant 0 : index
    %c0_10 = arith.constant 0 : index
    %16 = vector.load %arg3[%c0_9, %c0_10] : memref<8x128xf32, #tpu.memory_space<vmem>>, vector<8x128xf32>
    %17 = arith.addf %16, %15 : vector<8x128xf32>
    %c0_11 = arith.constant 0 : index
    %c0_12 = arith.constant 0 : index
    %18 = vector.load %arg3[%c0_11, %c0_12] : memref<8x128xf32, #tpu.memory_space<vmem>>, vector<8x128xf32>
    tpu.vector_store %arg3[%c0_11, %c0_12], %17 {strides = array<i32>} : memref<8x128xf32, #tpu.memory_space<vmem>>, vector<8x128xf32>,
    return
  }
  func.func @transform_0(%arg0: i32) -> (i32, i32, i32) {
    %c0_i32 = arith.constant 0 : i32
    %c0_i32_0 = arith.constant 0 : i32
    %c0_i32_1 = arith.constant 0 : i32
    return %arg0, %c0_i32, %c0_i32_0 : i32, i32, i32
  }
  func.func @transform_1(%arg0: i32) -> (i32, i32, i32) {
    %c0_i32 = arith.constant 0 : i32
    %c0_i32_0 = arith.constant 0 : i32
    %c0_i32_1 = arith.constant 0 : i32
    return %arg0, %c0_i32, %c0_i32_0 : i32, i32, i32
  }
  func.func @transform_2(%arg0: i32) -> (i32, i32) {
    %c0_i32 = arith.constant 0 : i32
    %c0_i32_0 = arith.constant 0 : i32
    %c0_i32_1 = arith.constant 0 : i32
    return %c0_i32, %c0_i32_0 : i32, i32
  }
}

</mosaic_0001>

<llo_original>
// kernel: tpu_custom_call.1
$region0: #{tpu_custom_call.1}
  #allocation0 [shape = 'u32[]', space=smem, size = 0x4, offset = 0x4, fixed_abs, tag = 'smem constant byte address 0x4 - core index']
  #allocation1 [shape = 'u32[144,128]{1,0:T(1,128)}', space=vmem, size = 0x12000, scoped, tag = 'internal scratch']
  %s0 = inlined_call_operand.hbm [shape: f32[2,8,128], index: 0, kind: input, shape index: {}]
  %s1 = inlined_call_operand.hbm [shape: f32[2,8,128], index: 1, kind: input, shape index: {}]
  %s2 = inlined_call_operand.hbm [shape: f32[8,128], index: 2, kind: output, shape index: {}]
  %s3 = sld [smem:[#allocation0]]
  $region30: #{tpu_custom_call.1} parent=0
    _
  %s5 = ssub.s32 1, %s3
  %s6 = scalar_select 0, %s5, %s3
  $region1: #{tpu_custom_call.1} parent=0
    #allocation2 [shape = 'u8[8192]{0}', space=vmem, size = 0x2000, scoped, tag = 'input window, operand 0, single buffered']
    #allocation3 [shape = 's32[1]{0}', space=sflag, size = 0x4, scoped, tag = 'scoped memory for tpu_custom_call.1']
    #allocation4 [shape = 's32[1]{0}', space=sflag, size = 0x4, scoped, tag = 'scoped memory for tpu_custom_call.1']
    #allocation5 [shape = 'u8[8192]{0}', space=vmem, size = 0x2000, scoped, tag = 'input window, operand 1, single buffered']
    #allocation6 [shape = 's32[1]{0}', space=sflag, size = 0x4, scoped, tag = 'scoped memory for tpu_custom_call.1']
    #allocation7 [shape = 'u8[4096]{0}', space=vmem, size = 0x1000, scoped, tag = 'output window, operand 0, single buffered']
    %7 = vsyncpa [#allocation3], 0
    %8 = vsyncpa [#allocation6], 0
    %9 = vsyncpa [#allocation4], 0
    // Predicated region
    $region2: #{tpu_custom_call.1} parent=1 // pred_check
      _
    $region3: #{tpu_custom_call.1} parent=1 // pred_check_branch
      %11 = sbr.rel (0) target = $region5
    $region4: #{tpu_custom_call.1} parent=1 // pred_region
      %s13 = ssub.s32 256, 256
      %14 = vsyncadd [#allocation3], %s13
      %s15 = sshll.u32 [#allocation2], 4
      %s16 = int_to_ptr.vmem [resolvable:$true] %s15
      %21 = dma.hbm_to_vmem [thread:$0]  %s0, 256, %s16, [#allocation3], 128, 128, 8
    $region5: #{tpu_custom_call.1} parent=1 // pred_fallthru
      _
    // Predicated region
    $region6: #{tpu_custom_call.1} parent=1 // pred_check
      _
    $region7: #{tpu_custom_call.1} parent=1 // pred_check_branch
      %23 = sbr.rel (0) target = $region9
    $region8: #{tpu_custom_call.1} parent=1 // pred_region
      %s25 = ssub.s32 256, 256
      %26 = vsyncadd [#allocation6], %s25
      %s27 = sshll.u32 [#allocation5], 4
      %s28 = int_to_ptr.vmem [resolvable:$true] %s27
      %33 = dma.hbm_to_vmem [thread:$0]  %s1, 256, %s28, [#allocation6], 128, 128, 8
    $region9: #{tpu_custom_call.1} parent=1 // pred_fallthru
      _
    // Predicated region
    $region10: #{tpu_custom_call.1} parent=1 // pred_check
      _
    $region11: #{tpu_custom_call.1} parent=1 // pred_check_branch
      %35 = sbr.rel (0) target = $region13
    $region12: #{tpu_custom_call.1} parent=1 // pred_region
      %36 = dma.done [#allocation3], 256
    $region13: #{tpu_custom_call.1} parent=1 // pred_fallthru
      _
    // Predicated region
    $region14: #{tpu_custom_call.1} parent=1 // pred_check
      _
    $region15: #{tpu_custom_call.1} parent=1 // pred_check_branch
      %38 = sbr.rel (0) target = $region17
    $region16: #{tpu_custom_call.1} parent=1 // pred_region
      %39 = dma.done [#allocation6], 256
    $region17: #{tpu_custom_call.1} parent=1 // pred_fallthru
      _
    %p40 = scmp.eq.s32.totalorder 0, 0
    // Predicated region
    $region18: #{tpu_custom_call.1} parent=1 // pred_check
      %p41 = pneg %p40
    $region19: #{tpu_custom_call.1} parent=1 // pred_check_branch
      %43 = sbr.rel (%p41) target = $region21
    $region20: #{tpu_custom_call.1} parent=1 // pred_region
      %44 = vst [vmem:[#allocation7] sm:$0xff] 0.0
    $region21: #{tpu_custom_call.1} parent=1 // pred_fallthru
      _
    %v45 = vld [vmem:[#allocation2] sm:$0xff]
    %v46 = vld [vmem:[#allocation2 + $0x8] sm:$0xff]
    %v47 = vld [vmem:[#allocation5] sm:$0xff]
    %v48 = vld [vmem:[#allocation5 + $0x8] sm:$0xff]
    %v49 = vsub.f32 %v45, %v47
    %v50 = vsub.f32 %v46, %v48
    %v51 = vand.u32 2147483647, %v49
    %v52 = vand.u32 2147483647, %v50
    %v53 = vmin.f32 %v51, 1.0
    %v54 = vmin.f32 %v52, 1.0
    %v55 = vmul.f32 %v53, 0.5
    %v56 = vmul.f32 %v54, 0.5
    %v57 = vsub.f32 %v51, %v55
    %v58 = vsub.f32 %v52, %v56
    %v59 = vmul.f32 %v53, %v57
    %v60 = vmul.f32 %v54, %v58
    %v61 = vadd.f32 %v59, %v60
    %v62 = vadd.f32 %v61, 0.0
    %v63 = vld [vmem:[#allocation7] sm:$0xff]
    %v64 = vadd.f32 %v63, %v62
    %65 = vst [vmem:[#allocation7] sm:$0xff] %v64
    // Predicated region
    $region22: #{tpu_custom_call.1} parent=1 // pred_check
      _
    $region23: #{tpu_custom_call.1} parent=1 // pred_check_branch
      %67 = sbr.rel (0) target = $region25
    $region24: #{tpu_custom_call.1} parent=1 // pred_region
      %s69 = ssub.s32 128, 128
      %70 = vsyncadd [#allocation4], %s69
      %s72 = sshll.u32 [#allocation7], 4
      %s73 = int_to_ptr.vmem [resolvable:$true] %s72
      %75 = dma.vmem_to_hbm [thread:$0]  %s73, 128, %s2, [#allocation4]
    $region25: #{tpu_custom_call.1} parent=1 // pred_fallthru
      _
    // Predicated region
    $region26: #{tpu_custom_call.1} parent=1 // pred_check
      _
    $region27: #{tpu_custom_call.1} parent=1 // pred_check_branch
      %77 = sbr.rel (0) target = $region29
    $region28: #{tpu_custom_call.1} parent=1 // pred_region
      %78 = dma.done [#allocation4], 128
    $region29: #{tpu_custom_call.1} parent=1 // pred_fallthru
      _
    %79 = vsyncpa [#allocation3], 1
    %80 = vsyncpa [#allocation6], 1
    %81 = vsyncpa [#allocation4], 1

</llo_original>
